<compile_context>
chip_gen: v6e
topology: v6e:2x2x1
jax: 0.10.0
libtpu: 0.0.40
codegen_flags: <defaults>
</compile_context>

<pallas_src>
import math
import jax
import jax.numpy as jnp
from jax.experimental import pallas as pl
from jax.experimental.pallas import tpu as pltpu


# --------------------------- fused kernel body --------------------------------

def _channel_att_kernel(im_ref, w1_ref, b1_ref, w2_ref, b2_ref, cv_ref,
                        out_ref, att_ref):
    d = pl.program_id(2)

    # Attention map for this (batch, HW-window): computed once, reused over D.
    @pl.when(d == 0)
    def _():
        # 1x1 conv #1 (BN scale pre-folded into w1): (Cmid,Cim)@(Cim,HWt)
        x = jnp.dot(w1_ref[...], im_ref[0].astype(jnp.float32),
                    preferred_element_type=jnp.float32)
        x = x + b1_ref[...]                       # folded BN bias
        x = jnp.where(x > 0, x, 0.01 * x)         # LeakyReLU(0.01)
        # 1x1 conv #2: (Ccv,Cmid)@(Cmid,HWt) + bias
        a = jnp.dot(w2_ref[...], x, preferred_element_type=jnp.float32) + b2_ref[...]
        att_ref[...] = jax.nn.sigmoid(a).astype(att_ref.dtype)

    # Bandwidth-bound broadcast multiply over D, in the cost volume's dtype.
    att = att_ref[...]                             # (Ccv, HWt), cv.dtype
    out_ref[0] = att[:, None, :] * cv_ref[0]       # (Ccv, Dt, HWt)


# ------------------------------ tiling helpers --------------------------------

def _vmem_budget():
    """(cv-block target bytes, vmem_limit_bytes or None), per TPU generation."""
    kind = ""
    try:
        kind = jax.devices()[0].device_kind.lower()
    except Exception:
        pass
    if "v7" in kind:
        return 4 * 1024 * 1024, 48 << 20    # bigger steps; stay well under 64 MiB phys
    if "v6" in kind:
        return 6 * 1024 * 1024, 64 << 20    # 128 MiB VMEM -> plenty of headroom
    return 2 * 1024 * 1024, None            # v5e / unknown: default scoped VMEM


def _pick_tiles(Ccv, D, HW, itemsize, B, target_bytes):
    """Pick (Dtile, HWtile): lane-dense, ~target-sized cv block, legal (8,128)."""
    if HW % 128 == 0:
        hw_t = min(HW, 4096)                               # lane multiple of 128
        if B == 1 and hw_t == HW and HW >= 256:
            hw_t = max(128, (HW // 2) // 128 * 128)        # >=2 blocks for 2-TC v7x
    else:
        hw_t = HW                                          # full dim -> always legal
    if D <= 8 or Ccv * D * hw_t * itemsize <= target_bytes:
        d_t = D                                            # full dim -> always legal
        # TODO(synk): if production D < 8 and perf matters, collapse D into the
        # lane axis to avoid half-empty sublanes / masked stores.
    else:
        d_t = max(8, (target_bytes // (Ccv * hw_t * itemsize)) // 8 * 8)
        d_t = min(d_t, D)
    return d_t, hw_t


# --------------------------------- wrapper -------------------------------------

def channel_att_pallas(cv_ncdhw, im_nchw, w1, s1, b1, w2, b2, *, donate_cv=False):
    """cv_ncdhw: [B, Ccv, D, H, W], im_nchw: [B, Cim, H, W] (PyTorch conventions).

    w1: [Cmid, Cim] 1x1-conv weight (no bias); s1/b1: folded BN scale/bias;
    w2: [Ccv, Cmid] 1x1-conv weight; b2: [Ccv] bias.
    Set donate_cv=True only if the cost volume buffer is dead after this op
    (halves the HBM footprint of the 5-D volume via input/output aliasing).
    """
    B, Ccv, D, H, W = cv_ncdhw.shape
    _, Cim, _, _ = im_nchw.shape
    Cmid = w1.shape[0]
    HW = H * W

    # Free reshapes only — no transpose of the (large) cost volume.
    im = im_nchw.reshape(B, Cim, HW)
    cv = cv_ncdhw.reshape(B, Ccv, D, HW)

    # Fold BN scale into the first conv weight; keep only the bias add.
    w1f = (s1.reshape(Cmid, 1) * w1).astype(jnp.float32)
    b1c = b1.reshape(Cmid, 1).astype(jnp.float32)
    w2f = w2.astype(jnp.float32)
    b2c = b2.reshape(Ccv, 1).astype(jnp.float32)

    itemsize = jnp.dtype(cv.dtype).itemsize
    target_bytes, vmem_limit = _vmem_budget()
    d_t, hw_t = _pick_tiles(Ccv, D, HW, itemsize, B, target_bytes)
    n_hw = pl.cdiv(HW, hw_t)
    n_d = pl.cdiv(D, d_t)

    cost = pl.CostEstimate(
        flops=B * D * Ccv * HW + 2 * B * HW * (Cmid * Cim + Ccv * Cmid),
        transcendentals=B * Ccv * HW,
        bytes_accessed=2 * B * D * Ccv * HW * itemsize + B * Cim * HW * itemsize,
    )

    cp_kwargs = dict(dimension_semantics=("parallel", "parallel", "arbitrary"))
    if vmem_limit is not None:
        cp_kwargs["vmem_limit_bytes"] = vmem_limit

    out = pl.pallas_call(
        _channel_att_kernel,
        out_shape=jax.ShapeDtypeStruct((B, Ccv, D, HW), cv.dtype),
        grid_spec=pltpu.PrefetchScalarGridSpec(
            num_scalar_prefetch=0,
            grid=(B, n_hw, n_d),                     # d innermost: att reused over D
            in_specs=[
                pl.BlockSpec((1, Cim, hw_t), lambda b, h, d: (b, 0, h)),   # im slice
                pl.BlockSpec((Cmid, Cim), lambda b, h, d: (0, 0)),         # w1 (BN folded)
                pl.BlockSpec((Cmid, 1), lambda b, h, d: (0, 0)),           # bn bias
                pl.BlockSpec((Ccv, Cmid), lambda b, h, d: (0, 0)),         # w2
                pl.BlockSpec((Ccv, 1), lambda b, h, d: (0, 0)),            # b2
                pl.BlockSpec((1, Ccv, d_t, hw_t), lambda b, h, d: (b, 0, d, h)),  # cv
            ],
            out_specs=pl.BlockSpec((1, Ccv, d_t, hw_t), lambda b, h, d: (b, 0, d, h)),
            scratch_shapes=[pltpu.VMEM((Ccv, hw_t), cv.dtype)],            # att tile
        ),
        compiler_params=pltpu.CompilerParams(**cp_kwargs),
        cost_estimate=cost,
        input_output_aliases=({5: 0} if donate_cv else {}),
    )(im, w1f, b1c, w2f, b2c, cv)

    # Output is already NCDHW; only a free reshape back to 5-D.
    return out.reshape(B, Ccv, D, H, W)


# ------------------------------- pure-JAX reference ----------------------------

def channel_att_reference(cv, im, w1, s1, b1, w2, b2):
    x = jnp.einsum('oc,bchw->bohw', w1, im)
    x = x * s1[None, :, None, None] + b1[None, :, None, None]
    x = jnp.where(x > 0, x, 0.01 * x)
    a = jnp.einsum('oc,bchw->bohw', w2, x) + b2[None, :, None, None]
    att = jax.nn.sigmoid(a)[:, :, None, :, :]   # unsqueeze(2)
    return att * cv


if __name__ == "__main__":
    # small shapes consistent with the module
    B, im_chan, cv_chan, D, H, W = 2, 8, 8, 4, 16, 16
    mid = im_chan // 2
    eps = 1e-5

    key = jax.random.PRNGKey(0)
    k_cv, k_im, k_w1, k_w2, k_b2 = jax.random.split(key, 5)

    cv = jax.random.normal(k_cv, (B, cv_chan, D, H, W), jnp.float32)   # NCDHW
    im = jax.random.normal(k_im, (B, im_chan, H, W), jnp.float32)      # NCHW

    # deterministic weight_init: conv weight ~ N(0, sqrt(2 / (kH*kW*out_channels)))
    w1 = jax.random.normal(k_w1, (mid, im_chan), jnp.float32) * math.sqrt(2.0 / (1 * 1 * mid))
    w2 = jax.random.normal(k_w2, (cv_chan, mid), jnp.float32) * math.sqrt(2.0 / (1 * 1 * cv_chan))
    b2 = 0.1 * jax.random.normal(k_b2, (cv_chan,), jnp.float32)
    # BatchNorm2d (eval mode, default running stats) folded into per-channel scale/bias
    s1 = jnp.full((mid,), 1.0 / math.sqrt(1.0 + eps), jnp.float32)   # gamma/sqrt(var+eps)
    b1 = jnp.zeros((mid,), jnp.float32)                              # beta - mean*scale

    out = channel_att_pallas(cv, im, w1, s1, b1, w2, b2)
    out = jax.block_until_ready(out)

    ref = channel_att_reference(cv, im, w1, s1, b1, w2, b2)
    assert out.shape == (B, cv_chan, D, H, W)
    assert jnp.allclose(out, ref, atol=1e-5, rtol=1e-5)

    print("KERNEL_OK")
</pallas_src>

<mosaic_0001>
module attributes {stable_mosaic.version = 11 : i64} {
  func.func @_channel_att_kernel(%arg0: i32, %arg1: i32, %arg2: i32, %arg3: memref<1x8x256xf32, #tpu.memory_space<vmem>>, %arg4: memref<4x8xf32, #tpu.memory_space<vmem>>, %arg5: memref<4x1xf32, #tpu.memory_space<vmem>>, %arg6: memref<8x4xf32, #tpu.memory_space<vmem>>, %arg7: memref<8x1xf32, #tpu.memory_space<vmem>>, %arg8: memref<1x8x4x256xf32, #tpu.memory_space<vmem>>, %arg9: memref<1x8x4x256xf32, #tpu.memory_space<vmem>>, %arg10: memref<8x256xf32, #tpu.memory_space<vmem>>) attributes {dimension_semantics = [#tpu.dimension_semantics<parallel>, #tpu.dimension_semantics<parallel>, #tpu.dimension_semantics<arbitrary>], iteration_bounds = array<i64: 2, 1, 1>, scalar_prefetch = 0 : i64, scratch_operands = 1 : i64, tpu.core_type = #tpu.core_type<tc>, window_params = [{transform_indices = @transform_0, window_bounds = array<i64: 1, 8, 256>}, {pipeline_mode = #tpu.pipeline_mode<synchronous>, transform_indices = @transform_1, window_bounds = array<i64: 4, 8>}, {pipeline_mode = #tpu.pipeline_mode<synchronous>, transform_indices = @transform_2, window_bounds = array<i64: 4, 1>}, {pipeline_mode = #tpu.pipeline_mode<synchronous>, transform_indices = @transform_3, window_bounds = array<i64: 8, 4>}, {pipeline_mode = #tpu.pipeline_mode<synchronous>, transform_indices = @transform_4, window_bounds = array<i64: 8, 1>}, {transform_indices = @transform_5, window_bounds = array<i64: 1, 8, 4, 256>}, {transform_indices = @transform_6, window_bounds = array<i64: 1, 8, 4, 256>}]} {
    %c0_i32 = arith.constant 0 : i32
    %0 = arith.cmpi eq, %arg2, %c0_i32 : i32
    %1 = arith.extui %0 : i1 to i32
    %c0_i32_0 = arith.constant 0 : i32
    %2 = arith.cmpi ne, %1, %c0_i32_0 : i32
    scf.if %2 {
      %c0_10 = arith.constant 0 : index
      %c0_11 = arith.constant 0 : index
      %12 = vector.load %arg4[%c0_10, %c0_11] : memref<4x8xf32, #tpu.memory_space<vmem>>, vector<4x8xf32>
      %c0_12 = arith.constant 0 : index
      %c0_13 = arith.constant 0 : index
      %c0_14 = arith.constant 0 : index
      %13 = vector.load %arg3[%c0_12, %c0_13, %c0_14] : memref<1x8x256xf32, #tpu.memory_space<vmem>>, vector<1x8x256xf32>
      %14 = vector.shape_cast %13 : vector<1x8x256xf32> to vector<8x256xf32>
      %cst = arith.constant dense<0.000000e+00> : vector<4x256xf32>
      %15 = tpu.matmul %12, %14, %cst {dimension_numbers = #tpu.dot_dimension_numbers<[1], [0], [0], [1], [0, 0, 1, 1], [], []>} : vector<4x8xf32>, vector<8x256xf32>, vector<4x256xf32> -> vector<4x256xf32>
      %c0_15 = arith.constant 0 : index
      %c0_16 = arith.constant 0 : index
      %16 = vector.load %arg5[%c0_15, %c0_16] : memref<4x1xf32, #tpu.memory_space<vmem>>, vector<4x1xf32>
      %17 = vector.broadcast %16 : vector<4x1xf32> to vector<4x256xf32>
      %18 = arith.addf %15, %17 : vector<4x256xf32>
      %cst_17 = arith.constant 0.000000e+00 : f32
      %19 = vector.broadcast %cst_17 : f32 to vector<4x256xf32>
      %20 = arith.cmpf ogt, %18, %19 : vector<4x256xf32>
      %cst_18 = arith.constant 0.00999999977 : f32
      %21 = vector.broadcast %cst_18 : f32 to vector<4x256xf32>
      %22 = arith.mulf %21, %18 : vector<4x256xf32>
      %23 = arith.select %20, %18, %22 : vector<4x256xi1>, vector<4x256xf32>
      %c0_19 = arith.constant 0 : index
      %c0_20 = arith.constant 0 : index
      %24 = vector.load %arg6[%c0_19, %c0_20] : memref<8x4xf32, #tpu.memory_space<vmem>>, vector<8x4xf32>
      %cst_21 = arith.constant dense<0.000000e+00> : vector<8x256xf32>
      %25 = tpu.matmul %24, %23, %cst_21 {dimension_numbers = #tpu.dot_dimension_numbers<[1], [0], [0], [1], [0, 0, 1, 1], [], []>} : vector<8x4xf32>, vector<4x256xf32>, vector<8x256xf32> -> vector<8x256xf32>
      %c0_22 = arith.constant 0 : index
      %c0_23 = arith.constant 0 : index
      %26 = vector.load %arg7[%c0_22, %c0_23] : memref<8x1xf32, #tpu.memory_space<vmem>>, vector<8x1xf32>
      %27 = vector.broadcast %26 : vector<8x1xf32> to vector<8x256xf32>
      %28 = arith.addf %25, %27 : vector<8x256xf32>
      %29 = arith.negf %28 : vector<8x256xf32>
      %30 = math.exp %29 : vector<8x256xf32>
      %cst_24 = arith.constant 1.000000e+00 : f32
      %31 = vector.broadcast %cst_24 : f32 to vector<8x256xf32>
      %32 = arith.addf %31, %30 : vector<8x256xf32>
      %33 = arith.divf %31, %32 : vector<8x256xf32>
      %c0_25 = arith.constant 0 : index
      %c0_26 = arith.constant 0 : index
      %34 = vector.load %arg10[%c0_25, %c0_26] : memref<8x256xf32, #tpu.memory_space<vmem>>, vector<8x256xf32>
      tpu.vector_store %arg10[%c0_25, %c0_26], %33 {strides = array<i32>} : memref<8x256xf32, #tpu.memory_space<vmem>>, vector<8x256xf32>,
    } else {
    }
    %c0 = arith.constant 0 : index
    %c0_1 = arith.constant 0 : index
    %3 = vector.load %arg10[%c0, %c0_1] : memref<8x256xf32, #tpu.memory_space<vmem>>, vector<8x256xf32>
    %4 = vector.shape_cast %3 : vector<8x256xf32> to vector<8x1x256xf32>
    %c0_2 = arith.constant 0 : index
    %c0_3 = arith.constant 0 : index
    %c0_4 = arith.constant 0 : index
    %c0_5 = arith.constant 0 : index
    %5 = vector.load %arg8[%c0_2, %c0_3, %c0_4, %c0_5] : memref<1x8x4x256xf32, #tpu.memory_space<vmem>>, vector<1x8x4x256xf32>
    %6 = vector.shape_cast %5 : vector<1x8x4x256xf32> to vector<8x4x256xf32>
    %7 = vector.broadcast %4 : vector<8x1x256xf32> to vector<8x4x256xf32>
    %8 = arith.mulf %7, %6 : vector<8x4x256xf32>
    %c0_6 = arith.constant 0 : index
    %c0_7 = arith.constant 0 : index
    %c0_8 = arith.constant 0 : index
    %c0_9 = arith.constant 0 : index
    %9 = vector.load %arg9[%c0_6, %c0_7, %c0_8, %c0_9] : memref<1x8x4x256xf32, #tpu.memory_space<vmem>>, vector<1x8x4x256xf32>
    %10 = vector.shape_cast %9 : vector<1x8x4x256xf32> to vector<8x4x256xf32>
    %11 = vector.shape_cast %8 : vector<8x4x256xf32> to vector<1x8x4x256xf32>
    tpu.vector_store %arg9[%c0_6, %c0_7, %c0_8, %c0_9], %11 {strides = array<i32>} : memref<1x8x4x256xf32, #tpu.memory_space<vmem>>, vector<1x8x4x256xf32>,
    return
  }
  func.func @transform_0(%arg0: i32, %arg1: i32, %arg2: i32) -> (i32, i32, i32) {
    %c0_i32 = arith.constant 0 : i32
    %c0_i32_0 = arith.constant 0 : i32
    return %arg0, %c0_i32, %arg1 : i32, i32, i32
  }
  func.func @transform_1(%arg0: i32, %arg1: i32, %arg2: i32) -> (i32, i32) {
    %c0_i32 = arith.constant 0 : i32
    %c0_i32_0 = arith.constant 0 : i32
    %c0_i32_1 = arith.constant 0 : i32
    return %c0_i32, %c0_i32_0 : i32, i32
  }
  func.func @transform_2(%arg0: i32, %arg1: i32, %arg2: i32) -> (i32, i32) {
    %c0_i32 = arith.constant 0 : i32
    %c0_i32_0 = arith.constant 0 : i32
    %c0_i32_1 = arith.constant 0 : i32
    return %c0_i32, %c0_i32_0 : i32, i32
  }
  func.func @transform_3(%arg0: i32, %arg1: i32, %arg2: i32) -> (i32, i32) {
    %c0_i32 = arith.constant 0 : i32
    %c0_i32_0 = arith.constant 0 : i32
    %c0_i32_1 = arith.constant 0 : i32
    return %c0_i32, %c0_i32_0 : i32, i32
  }
  func.func @transform_4(%arg0: i32, %arg1: i32, %arg2: i32) -> (i32, i32) {
    %c0_i32 = arith.constant 0 : i32
    %c0_i32_0 = arith.constant 0 : i32
    %c0_i32_1 = arith.constant 0 : i32
    return %c0_i32, %c0_i32_0 : i32, i32
  }
  func.func @transform_5(%arg0: i32, %arg1: i32, %arg2: i32) -> (i32, i32, i32, i32) {
    %c0_i32 = arith.constant 0 : i32
    %c0_i32_0 = arith.constant 0 : i32
    return %arg0, %c0_i32, %arg2, %arg1 : i32, i32, i32, i32
  }
  func.func @transform_6(%arg0: i32, %arg1: i32, %arg2: i32) -> (i32, i32, i32, i32) {
    %c0_i32 = arith.constant 0 : i32
    %c0_i32_0 = arith.constant 0 : i32
    return %arg0, %c0_i32, %arg2, %arg1 : i32, i32, i32, i32
  }
}

</mosaic_0001>

<llo_original>
// kernel: tpu_custom_call.1
$region0: #{tpu_custom_call.1}
  #allocation0 [shape = 'u32[]', space=smem, size = 0x4, offset = 0x4, fixed_abs, tag = 'smem constant byte address 0x4 - core index']
  #allocation1 [shape = 'u32[144,128]{1,0:T(1,128)}', space=vmem, size = 0x12000, scoped, tag = 'internal scratch']
  #allocation2 [shape = 'f32[8,256]{1,0:T(8,128)}', space=vmem, size = 0x2000, scoped, tag = 'scratch operand']
  %s0 = inlined_call_operand.hbm [shape: f32[2,8,256], index: 0, kind: input, shape index: {}]
  %s1 = inlined_call_operand.vmem [shape: f32[4,8], index: 1, kind: input, shape index: {}]
  %s2 = inlined_call_operand.vmem [shape: f32[4,1], index: 2, kind: input, shape index: {}]
  %s3 = inlined_call_operand.vmem [shape: f32[8,4], index: 3, kind: input, shape index: {}]
  %s4 = inlined_call_operand.vmem [shape: f32[8,1], index: 4, kind: input, shape index: {}]
  %s5 = inlined_call_operand.hbm [shape: f32[2,8,4,256], index: 5, kind: input, shape index: {}]
  %s6 = inlined_call_operand.hbm [shape: f32[2,8,4,256], index: 6, kind: output, shape index: {}]
  %s7 = sld [smem:[#allocation0]]
  $region69: #{tpu_custom_call.1} parent=0
    _
  %s9 = ssub.s32 1, %s7
  %s10 = scalar_select 0, %s9, %s7
  $region1: #{tpu_custom_call.1} parent=0
    #allocation3 [shape = 'u8[16384]{0}', space=vmem, size = 0x4000, scoped, tag = 'input window, operand 0']
    #allocation4 [shape = 's32[2]{0}', space=sflag, size = 0x8, scoped, tag = 'scoped memory for tpu_custom_call.1']
    #allocation5 [shape = 's32[2]{0}', space=sflag, size = 0x8, scoped, tag = 'scoped memory for tpu_custom_call.1']
    #allocation6 [shape = 'u8[65536]{0}', space=vmem, size = 0x10000, scoped, tag = 'input window, operand 5']
    #allocation7 [shape = 's32[2]{0}', space=sflag, size = 0x8, scoped, tag = 'scoped memory for tpu_custom_call.1']
    #allocation8 [shape = 'u8[65536]{0}', space=vmem, size = 0x10000, scoped, tag = 'output window, operand 0']
    %11 = vsyncpa [#allocation4], 0
    %s12 = scalar_lea.sflag [#allocation4], 1
    %13 = vsyncpa %s12, 0
    %14 = vsyncpa [#allocation7], 0
    %s15 = scalar_lea.sflag [#allocation7], 1
    %16 = vsyncpa %s15, 0
    %17 = vsyncpa [#allocation5], 0
    %s18 = scalar_lea.sflag [#allocation5], 1
    %19 = vsyncpa %s18, 0
    loop: start=0, step=1, limit=4
    $region2: #{tpu_custom_call.1} parent=1 // loop_pre_header
      _
    $region3: #{tpu_custom_call.1} parent=1 // loop_header
      %s21 = sphi 0, %s25
      %p22 = scmp.ge.s32.totalorder %s21, 4
      %s28 = sphi 0, %s47
      %s29 = sphi 0, %s43
      %s30 = sphi 0, %s39
      %s31 = sphi 0, %s28
      %s32 = sphi 0, %s29
      %s33 = sphi 0, %s30
      %s34 = sphi 0, %s31
      %s35 = sphi 0, %s32
      %s36 = sphi 0, %s33
      %s52 = sphi 0, %s54
      %s55 = sphi 0, %s52
      %s56 = sphi 0, %s55
      %s72 = sphi 0, %s56
      %s76 = sphi 0, %s76
      %s78 = sphi 0, %s76
      %s79 = sphi 0, %s78
      %s93 = sphi 0, %s79
      %s97 = sphi 0, %s97
      %s99 = sphi 0, %s97
      %s100 = sphi 0, %s99
      %s114 = sphi 0, %s100
      %s118 = sphi 0, %s118
      %s120 = sphi 0, %s118
      %s121 = sphi 0, %s120
      %s135 = sphi 0, %s121
      %s139 = sphi 0, %s139
      %s141 = sphi 0, %s139
      %s142 = sphi 0, %s141
      %s156 = sphi 0, %s142
      %s166 = sphi 0, %s168
      %s169 = sphi 0, %s166
      %s170 = sphi 0, %s169
      %s186 = sphi 0, %s170
      %s196 = sphi 0, %s198
      %s199 = sphi 0, %s196
      %s200 = sphi 0, %s199
      %s216 = sphi 0, %s200
    $region4: #{tpu_custom_call.1} parent=1 // loop_header_branch
      %24 = sbr.rel (%p22) target = $region8
    $region5: #{tpu_custom_call.1} parent=1 // loop_body
      %s26 = ssub.s32 %s21, 1
      %s27 = ssub.s32 %s21, 2
      %s37 = sadd.s32 1, %s30
      %p38 = scmp.ge.s32.totalorder %s37, 1
      %s39 = scalar_select %p38, 0, %s37
      %s40 = sadd.s32 1, %s29
      %s41 = scalar_select %p38, %s40, %s29
      %p42 = scmp.ge.s32.totalorder %s41, 1
      %s43 = scalar_select %p42, 0, %s41
      %s44 = sadd.s32 1, %s28
      %s45 = scalar_select %p42, %s44, %s28
      %p46 = scmp.ge.s32.totalorder %s45, 2
      %s47 = scalar_select %p46, 0, %s45
      %s48 = ssub.s32 %s28, %s47
      %s49 = ssub.s32 %s29, %s43
      %s50 = sor.u32 %s48, %s49
      %p51 = scmp.eq.s32.totalorder %s50, 0
      %s53 = sadd.s32 %s52, 1
      %s54 = scalar_select %p51, %s52, %s53
      %p57 = pneg %p51
      %p58 = scmp.eq.s32.totalorder %s21, 1
      %p59 = por %p57, %p58
      %p60 = scmp.ne.s32.totalorder %s52, %s55
      %p61 = scmp.eq.s32.totalorder %s21, 0
      %p62 = por %p60, %p61
      %p63 = scmp.ne.s32.totalorder %s52, %s55
      %p64 = scmp.eq.s32.totalorder %s26, 1
      %p65 = por %p63, %p64
      %p66 = scmp.ne.s32.totalorder %s55, %s56
      %p67 = scmp.eq.s32.totalorder %s26, 0
      %p68 = por %p66, %p67
      %p69 = scmp.ne.s32.totalorder %s55, %s56
      %p70 = scmp.eq.s32.totalorder %s27, 1
      %p71 = por %p69, %p70
      %p73 = scmp.ne.s32.totalorder %s56, %s72
      %p74 = scmp.eq.s32.totalorder %s27, 0
      %p75 = por %p73, %p74
      %s77 = sadd.s32 %s76, 1
      %p80 = scmp.eq.s32.totalorder %s21, 1
      %p81 = scmp.ne.s32.totalorder %s76, %s78
      %p82 = scmp.eq.s32.totalorder %s21, 0
      %p83 = por %p81, %p82
      %p84 = scmp.ne.s32.totalorder %s76, %s78
      %p85 = scmp.eq.s32.totalorder %s26, 1
      %p86 = por %p84, %p85
      %p87 = scmp.ne.s32.totalorder %s78, %s79
      %p88 = scmp.eq.s32.totalorder %s26, 0
      %p89 = por %p87, %p88
      %p90 = scmp.ne.s32.totalorder %s78, %s79
      %p91 = scmp.eq.s32.totalorder %s27, 1
      %p92 = por %p90, %p91
      %p94 = scmp.ne.s32.totalorder %s79, %s93
      %p95 = scmp.eq.s32.totalorder %s27, 0
      %p96 = por %p94, %p95
      %s98 = sadd.s32 %s97, 1
      %p101 = scmp.eq.s32.totalorder %s21, 1
      %p102 = scmp.ne.s32.totalorder %s97, %s99
      %p103 = scmp.eq.s32.totalorder %s21, 0
      %p104 = por %p102, %p103
      %p105 = scmp.ne.s32.totalorder %s97, %s99
      %p106 = scmp.eq.s32.totalorder %s26, 1
      %p107 = por %p105, %p106
      %p108 = scmp.ne.s32.totalorder %s99, %s100
      %p109 = scmp.eq.s32.totalorder %s26, 0
      %p110 = por %p108, %p109
      %p111 = scmp.ne.s32.totalorder %s99, %s100
      %p112 = scmp.eq.s32.totalorder %s27, 1
      %p113 = por %p111, %p112
      %p115 = scmp.ne.s32.totalorder %s100, %s114
      %p116 = scmp.eq.s32.totalorder %s27, 0
      %p117 = por %p115, %p116
      %s119 = sadd.s32 %s118, 1
      %p122 = scmp.eq.s32.totalorder %s21, 1
      %p123 = scmp.ne.s32.totalorder %s118, %s120
      %p124 = scmp.eq.s32.totalorder %s21, 0
      %p125 = por %p123, %p124
      %p126 = scmp.ne.s32.totalorder %s118, %s120
      %p127 = scmp.eq.s32.totalorder %s26, 1
      %p128 = por %p126, %p127
      %p129 = scmp.ne.s32.totalorder %s120, %s121
      %p130 = scmp.eq.s32.totalorder %s26, 0
      %p131 = por %p129, %p130
      %p132 = scmp.ne.s32.totalorder %s120, %s121
      %p133 = scmp.eq.s32.totalorder %s27, 1
      %p134 = por %p132, %p133
      %p136 = scmp.ne.s32.totalorder %s121, %s135
      %p137 = scmp.eq.s32.totalorder %s27, 0
      %p138 = por %p136, %p137
      %s140 = sadd.s32 %s139, 1
      %p143 = scmp.eq.s32.totalorder %s21, 1
      %p144 = scmp.ne.s32.totalorder %s139, %s141
      %p145 = scmp.eq.s32.totalorder %s21, 0
      %p146 = por %p144, %p145
      %p147 = scmp.ne.s32.totalorder %s139, %s141
      %p148 = scmp.eq.s32.totalorder %s26, 1
      %p149 = por %p147, %p148
      %p150 = scmp.ne.s32.totalorder %s141, %s142
      %p151 = scmp.eq.s32.totalorder %s26, 0
      %p152 = por %p150, %p151
      %p153 = scmp.ne.s32.totalorder %s141, %s142
      %p154 = scmp.eq.s32.totalorder %s27, 1
      %p155 = por %p153, %p154
      %p157 = scmp.ne.s32.totalorder %s142, %s156
      %p158 = scmp.eq.s32.totalorder %s27, 0
      %p159 = por %p157, %p158
      %s160 = ssub.s32 %s28, %s47
      %s161 = ssub.s32 %s30, %s39
      %s162 = sor.u32 %s160, %s161
      %s163 = ssub.s32 %s29, %s43
      %s164 = sor.u32 %s162, %s163
      %p165 = scmp.eq.s32.totalorder %s164, 0
      %s167 = sadd.s32 %s166, 1
      %s168 = scalar_select %p165, %s166, %s167
      %p171 = pneg %p165
      %p172 = scmp.eq.s32.totalorder %s21, 1
      %p173 = por %p171, %p172
      %p174 = scmp.ne.s32.totalorder %s166, %s169
      %p175 = scmp.eq.s32.totalorder %s21, 0
      %p176 = por %p174, %p175
      %p177 = scmp.ne.s32.totalorder %s166, %s169
      %p178 = scmp.eq.s32.totalorder %s26, 1
      %p179 = por %p177, %p178
      %p180 = scmp.ne.s32.totalorder %s169, %s170
      %p181 = scmp.eq.s32.totalorder %s26, 0
      %p182 = por %p180, %p181
      %p183 = scmp.ne.s32.totalorder %s169, %s170
      %p184 = scmp.eq.s32.totalorder %s27, 1
      %p185 = por %p183, %p184
      %p187 = scmp.ne.s32.totalorder %s170, %s186
      %p188 = scmp.eq.s32.totalorder %s27, 0
      %p189 = por %p187, %p188
      %s190 = ssub.s32 %s28, %s47
      %s191 = ssub.s32 %s30, %s39
      %s192 = sor.u32 %s190, %s191
      %s193 = ssub.s32 %s29, %s43
      %s194 = sor.u32 %s192, %s193
      %p195 = scmp.eq.s32.totalorder %s194, 0
      %s197 = sadd.s32 %s196, 1
      %s198 = scalar_select %p195, %s196, %s197
      %p201 = pneg %p195
      %p202 = scmp.eq.s32.totalorder %s21, 1
      %p203 = por %p201, %p202
      %p204 = scmp.ne.s32.totalorder %s196, %s199
      %p205 = scmp.eq.s32.totalorder %s21, 0
      %p206 = por %p204, %p205
      %p207 = scmp.ne.s32.totalorder %s196, %s199
      %p208 = scmp.eq.s32.totalorder %s26, 1
      %p209 = por %p207, %p208
      %p210 = scmp.ne.s32.totalorder %s199, %s200
      %p211 = scmp.eq.s32.totalorder %s26, 0
      %p212 = por %p210, %p211
      %p213 = scmp.ne.s32.totalorder %s199, %s200
      %p214 = scmp.eq.s32.totalorder %s27, 1
      %p215 = por %p213, %p214
      %p217 = scmp.ne.s32.totalorder %s200, %s216
      %p218 = scmp.eq.s32.totalorder %s27, 0
      %p219 = por %p217, %p218
      %p220 = scmp.le.s32.totalorder 1, %s21
      %p221 = scmp.lt.s32.totalorder %s21, 3
      %p222 = pnand %p220, %p221
      %p223 = pneg %p222
      // Predicated region
      $region9: #{tpu_custom_call.1} parent=5 // pred_check
        _
      $region10: #{tpu_custom_call.1} parent=5 // pred_check_branch
        %225 = sbr.rel (%p222) target = $region12
      $region11: #{tpu_custom_call.1} parent=5 // pred_region
        %s226 = ssub.s32 %s21, 1
        // Predicated region
        $region13: #{tpu_custom_call.1} parent=11 // pred_check
          %p227 = pneg %p89
        $region14: #{tpu_custom_call.1} parent=11 // pred_check_branch
          %229 = sbr.rel (%p227) target = $region16
        $region15: #{tpu_custom_call.1} parent=11 // pred_region
          _
        $region16: #{tpu_custom_call.1} parent=11 // pred_fallthru
          _
        // Predicated region
        $region17: #{tpu_custom_call.1} parent=11 // pred_check
          %p230 = pneg %p110
        $region18: #{tpu_custom_call.1} parent=11 // pred_check_branch
          %232 = sbr.rel (%p230) target = $region20
        $region19: #{tpu_custom_call.1} parent=11 // pred_region
          _
        $region20: #{tpu_custom_call.1} parent=11 // pred_fallthru
          _
        // Predicated region
        $region21: #{tpu_custom_call.1} parent=11 // pred_check
          %p233 = pneg %p131
        $region22: #{tpu_custom_call.1} parent=11 // pred_check_branch
          %235 = sbr.rel (%p233) target = $region24
        $region23: #{tpu_custom_call.1} parent=11 // pred_region
          _
        $region24: #{tpu_custom_call.1} parent=11 // pred_fallthru
          _
        // Predicated region
        $region25: #{tpu_custom_call.1} parent=11 // pred_check
          %p236 = pneg %p152
        $region26: #{tpu_custom_call.1} parent=11 // pred_check_branch
          %238 = sbr.rel (%p236) target = $region28
        $region27: #{tpu_custom_call.1} parent=11 // pred_region
          _
        $region28: #{tpu_custom_call.1} parent=11 // pred_fallthru
          _
      $region12: #{tpu_custom_call.1} parent=5 // pred_fallthru
        _
      %p239 = scmp.lt.s32.totalorder %s21, 2
      // Predicated region
      $region29: #{tpu_custom_call.1} parent=5 // pred_check
        %p240 = pneg %p239
      $region30: #{tpu_custom_call.1} parent=5 // pred_check_branch
        %242 = sbr.rel (%p240) target = $region32
      $region31: #{tpu_custom_call.1} parent=5 // pred_region
        // Predicated region
        $region33: #{tpu_custom_call.1} parent=31 // pred_check
          %p243 = pneg %p62
        $region34: #{tpu_custom_call.1} parent=31 // pred_check_branch
          %245 = sbr.rel (%p243) target = $region36
        $region35: #{tpu_custom_call.1} parent=31 // pred_region
          %s246 = sand.u32 %s52, 1
          %s247 = scalar_lea.sflag [#allocation4], %s246
          %s248 = sand.u32 %s52, 1
          %s249 = smul.addr %s248, 16
          %s250 = scalar_lea.vmem [#allocation3], %s249
          %s251 = smul.u32 2, %s29
          %s253 = ssub.s32 256, 256
          %254 = vsyncadd %s247, %s253
          %s255 = smul.addr %s28, 2
          %s256 = sadd.s32 %s251, %s255
          %s257 = smul.addr %s256, 128
          %s258 = scalar_lea.hbm %s0, %s257
          %s260 = sshll.u32 %s250, 4
          %s261 = int_to_ptr.vmem [resolvable:$true] %s260
          %263 = dma.hbm_to_vmem [thread:$0]  %s258, 256, %s261, %s247
        $region36: #{tpu_custom_call.1} parent=31 // pred_fallthru
          _
        // Predicated region
        $region37: #{tpu_custom_call.1} parent=31 // pred_check
          %p264 = pneg %p176
        $region38: #{tpu_custom_call.1} parent=31 // pred_check_branch
          %266 = sbr.rel (%p264) target = $region40
        $region39: #{tpu_custom_call.1} parent=31 // pred_region
          %s267 = sand.u32 %s166, 1
          %s268 = scalar_lea.sflag [#allocation7], %s267
          %s269 = sand.u32 %s166, 1
          %s270 = smul.addr %s269, 64
          %s271 = scalar_lea.vmem [#allocation6], %s270
          %s272 = smul.u32 2, %s29
          %s274 = ssub.s32 1024, 1024
          %275 = vsyncadd %s268, %s274
          %s276 = smul.addr %s30, 2
          %s277 = sadd.s32 %s272, %s276
          %s278 = smul.addr %s28, 16
          %s279 = sadd.s32 %s277, %s278
          %s280 = smul.addr %s279, 64
          %s281 = scalar_lea.hbm %s5, %s280
          %s282 = sshll.u32 %s271, 4
          %s283 = int_to_ptr.vmem [resolvable:$true] %s282
          %288 = dma.hbm_to_vmem [thread:$0]  %s281, 1024, %s283, %s268, 128, 128, 8
        $region40: #{tpu_custom_call.1} parent=31 // pred_fallthru
          _
      $region32: #{tpu_custom_call.1} parent=5 // pred_fallthru
        _
      %p289 = scmp.le.s32.totalorder 1, %s21
      %p290 = scmp.lt.s32.totalorder %s21, 3
      %p291 = pnand %p289, %p290
      %p292 = pneg %p291
      // Predicated region
      $region41: #{tpu_custom_call.1} parent=5 // pred_check
        _
      $region42: #{tpu_custom_call.1} parent=5 // pred_check_branch
        %294 = sbr.rel (%p291) target = $region44
      $region43: #{tpu_custom_call.1} parent=5 // pred_region
        %s295 = ssub.s32 %s21, 1
        %s296 = sand.u32 %s55, 1
        %s297 = scalar_lea.sflag [#allocation4], %s296
        %s298 = sand.u32 %s55, 1
        %s299 = smul.addr %s298, 16
        %s300 = scalar_lea.vmem [#allocation3], %s299
        // Predicated region
        $region45: #{tpu_custom_call.1} parent=43 // pred_check
          %p301 = pneg %p68
        $region46: #{tpu_custom_call.1} parent=43 // pred_check_branch
          %303 = sbr.rel (%p301) target = $region48
        $region47: #{tpu_custom_call.1} parent=43 // pred_region
          %304 = dma.done %s297, 256
        $region48: #{tpu_custom_call.1} parent=43 // pred_fallthru
          _
        %s305 = sand.u32 %s169, 1
        %s306 = scalar_lea.sflag [#allocation7], %s305
        %s307 = sand.u32 %s169, 1
        %s308 = smul.addr %s307, 64
        %s309 = scalar_lea.vmem [#allocation6], %s308
        // Predicated region
        $region49: #{tpu_custom_call.1} parent=43 // pred_check
          %p310 = pneg %p182
        $region50: #{tpu_custom_call.1} parent=43 // pred_check_branch
          %312 = sbr.rel (%p310) target = $region52
        $region51: #{tpu_custom_call.1} parent=43 // pred_region
          %313 = dma.done %s306, 1024
        $region52: #{tpu_custom_call.1} parent=43 // pred_fallthru
          _
        %s314 = sand.u32 %s55, 1
        %s315 = scalar_lea.sflag [#allocation4], %s314
        %s316 = sand.u32 %s55, 1
        %s317 = smul.addr %s316, 16
        %s318 = scalar_lea.vmem [#allocation3], %s317
        %p319 = pneg %p68
        %p320 = pneg %p65
        %p321 = pneg %p89
        %p322 = pneg %p86
        %p323 = pneg %p110
        %p324 = pneg %p107
        %p325 = pneg %p131
        %p326 = pneg %p128
        %p327 = pneg %p152
        %p328 = pneg %p149
        %s329 = sand.u32 %s169, 1
        %s330 = scalar_lea.sflag [#allocation7], %s329
        %s331 = sand.u32 %s169, 1
        %s332 = smul.addr %s331, 64
        %s333 = scalar_lea.vmem [#allocation6], %s332
        %p334 = pneg %p182
        %p335 = pneg %p179
        %p336 = pneg %p212
        %p337 = pneg %p209
        %s338 = sand.u32 %s199, 1
        %s339 = scalar_lea.sflag [#allocation5], %s338
        %s340 = sand.u32 %s199, 1
        %s341 = smul.addr %s340, 64
        %s342 = scalar_lea.vmem [#allocation8], %s341
        %s343 = smul.u32 2, %s32
        %s344 = smul.u32 2, %s32
        %s345 = smul.u32 2, %s32
        %p346 = scmp.eq.s32.totalorder %s33, 0
        // Predicated region
        $region53: #{tpu_custom_call.1} parent=43 // pred_check
          %p347 = pneg %p346
        $region54: #{tpu_custom_call.1} parent=43 // pred_check_branch
          %349 = sbr.rel (%p347) target = $region56
        $region55: #{tpu_custom_call.1} parent=43 // pred_region
          %v350 = vld [vmem:[%s1] sm:$0xf]
          %v351 = vld [vmem:[%s300] sm:$0xff]
          %v352 = vld [vmem:[%s300 + $0x8] sm:$0xff]
          %v353 = vld [vmem:[%s2] sm:$0xf]
          %355 = vset.pattern.permute.xlu0 0
          %356 = vperm.xlu0 %355, %v353
          %v357 = vpop.permute.xlu0 %356
          %vm359 = vcmask 64512
          %v361 = vsel %vm359, %v350, 0
          %363 = vmatprep.subr.mxu0 0.0
          %364 = vmatpush1.msra.mxu0 0.0
          %365 = vmatprep.subr.mxu0 0.0
          %366 = vmatpush1.msra.mxu0 0.0
          %367 = vmatprep.subr.mxu0 0.0
          %368 = vmatpush1.msra.mxu0 0.0
          %369 = vmatprep.subr.mxu0 0.0
          %370 = vmatpush1.msra.mxu0 0.0
          %371 = vmatprep.subr.mxu0 0.0
          %372 = vmatpush1.msra.mxu0 0.0
          %373 = vmatprep.subr.mxu0 0.0
          %374 = vmatpush1.msra.mxu0 0.0
          %375 = vmatprep.subr.mxu0 0.0
          %376 = vmatpush1.msra.mxu0 0.0
          %377 = vmatprep.subr.mxu0 0.0
          %378 = vmatpush1.msra.mxu0 0.0
          %379 = vmatprep.subr.mxu0 0.0
          %380 = vmatpush1.msra.mxu0 0.0
          %381 = vmatprep.subr.mxu0 0.0
          %382 = vmatpush1.msra.mxu0 0.0
          %383 = vmatprep.subr.mxu0 0.0
          %384 = vmatpush1.msra.mxu0 0.0
          %385 = vmatprep.subr.mxu0 0.0
          %386 = vmatpush1.msra.mxu0 0.0
          %387 = vmatprep.subr.mxu0 0.0
          %388 = vmatpush1.msra.mxu0 0.0
          %389 = vmatprep.subr.mxu0 0.0
          %390 = vmatpush1.msra.mxu0 0.0
          %391 = vmatprep.subr.mxu0 0.0
          %392 = vmatpush1.msra.mxu0 0.0
          %393 = vmatprep.subr.mxu0 %v352
          %394 = vmatpush1.msra.mxu0 %v351
          %395 = vmatprep.subr.mxu0 0.0
          %396 = vmatpush2.msra.mxu0 0.0
          %397 = vmatprep.subr.mxu0 0.0
          %398 = vmatpush2.msra.mxu0 0.0
          %399 = vmatprep.subr.mxu0 0.0
          %400 = vmatpush2.msra.mxu0 0.0
          %401 = vmatprep.subr.mxu0 0.0
          %402 = vmatpush2.msra.mxu0 0.0
          %403 = vmatprep.subr.mxu0 0.0
          %404 = vmatpush2.msra.mxu0 0.0
          %405 = vmatprep.subr.mxu0 0.0
          %406 = vmatpush2.msra.mxu0 0.0
          %407 = vmatprep.subr.mxu0 0.0
          %408 = vmatpush2.msra.mxu0 0.0
          %409 = vmatprep.subr.mxu0 0.0
          %410 = vmatpush2.msra.mxu0 0.0
          %411 = vmatprep.subr.mxu0 0.0
          %412 = vmatpush2.msra.mxu0 0.0
          %413 = vmatprep.subr.mxu0 0.0
          %414 = vmatpush2.msra.mxu0 0.0
          %415 = vmatprep.subr.mxu0 0.0
          %416 = vmatpush2.msra.mxu0 0.0
          %417 = vmatprep.subr.mxu0 0.0
          %418 = vmatpush2.msra.mxu0 0.0
          %419 = vmatprep.subr.mxu0 0.0
          %420 = vmatpush2.msra.mxu0 0.0
          %421 = vmatprep.subr.mxu0 0.0
          %422 = vmatpush2.msra.mxu0 0.0
          %423 = vmatprep.subr.mxu0 0.0
          %424 = vmatpush2.msra.mxu0 0.0
          %425 = vmatprep.subr.mxu0 0.0
          %426 = vmatpush2.msra.mxu0 0.0
          %427 = vmatprep.mubr.f32.mxu0 0.0
          %428 = vmatmul.mubr.f32.gmra.mxu0 %v361
          %v429 = vpop.f32.mrf.mxu0
          %v430 = vadd.f32 %v357, %v429
          %v431 = vpop.f32.mrf.mxu0
          %v432 = vadd.f32 %v357, %v431
          %433 = vdwg.mxu0
          %vm434 = vcmp.gt.f32.partialorder %v430, 0.0
          %vm435 = vcmp.gt.f32.partialorder %v432, 0.0
          %v436 = vmul.f32 %v430, 0.01
          %v437 = vmul.f32 %v432, 0.01
          %v438 = vsel %vm434, %v430, %v436
          %v439 = vsel %vm435, %v432, %v437
          %v440 = vld [vmem:[%s3] sm:$0xff]
          %v441 = vld [vmem:[%s4] sm:$0xff]
          %443 = vset.pattern.permute.xlu0 0
          %444 = vperm.xlu0 %443, %v441
          %v445 = vpop.permute.xlu0 %444
          %vm447 = vcmask 31744
          %v449 = vsel %vm447, %v440, 0
          %vm451 = vcmask 1043456
          %v453 = vsel %vm451, %v438, 0
          %v456 = vsel %vm451, %v439, 0
          %458 = vmatprep.subr.mxu0 0.0
          %459 = vmatpush1.msra.mxu0 0.0
          %460 = vmatprep.subr.mxu0 0.0
          %461 = vmatpush1.msra.mxu0 0.0
          %462 = vmatprep.subr.mxu0 0.0
          %463 = vmatpush1.msra.mxu0 0.0
          %464 = vmatprep.subr.mxu0 0.0
          %465 = vmatpush1.msra.mxu0 0.0
          %466 = vmatprep.subr.mxu0 0.0
          %467 = vmatpush1.msra.mxu0 0.0
          %468 = vmatprep.subr.mxu0 0.0
          %469 = vmatpush1.msra.mxu0 0.0
          %470 = vmatprep.subr.mxu0 0.0
          %471 = vmatpush1.msra.mxu0 0.0
          %472 = vmatprep.subr.mxu0 0.0
          %473 = vmatpush1.msra.mxu0 0.0
          %474 = vmatprep.subr.mxu0 0.0
          %475 = vmatpush1.msra.mxu0 0.0
          %476 = vmatprep.subr.mxu0 0.0
          %477 = vmatpush1.msra.mxu0 0.0
          %478 = vmatprep.subr.mxu0 0.0
          %479 = vmatpush1.msra.mxu0 0.0
          %480 = vmatprep.subr.mxu0 0.0
          %481 = vmatpush1.msra.mxu0 0.0
          %482 = vmatprep.subr.mxu0 0.0
          %483 = vmatpush1.msra.mxu0 0.0
          %484 = vmatprep.subr.mxu0 0.0
          %485 = vmatpush1.msra.mxu0 0.0
          %486 = vmatprep.subr.mxu0 0.0
          %487 = vmatpush1.msra.mxu0 0.0
          %488 = vmatprep.subr.mxu0 %v456
          %489 = vmatpush1.msra.mxu0 %v453
          %490 = vmatprep.subr.mxu0 0.0
          %491 = vmatpush2.msra.mxu0 0.0
          %492 = vmatprep.subr.mxu0 0.0
          %493 = vmatpush2.msra.mxu0 0.0
          %494 = vmatprep.subr.mxu0 0.0
          %495 = vmatpush2.msra.mxu0 0.0
          %496 = vmatprep.subr.mxu0 0.0
          %497 = vmatpush2.msra.mxu0 0.0
          %498 = vmatprep.subr.mxu0 0.0
          %499 = vmatpush2.msra.mxu0 0.0
          %500 = vmatprep.subr.mxu0 0.0
          %501 = vmatpush2.msra.mxu0 0.0
          %502 = vmatprep.subr.mxu0 0.0
          %503 = vmatpush2.msra.mxu0 0.0
          %504 = vmatprep.subr.mxu0 0.0
          %505 = vmatpush2.msra.mxu0 0.0
          %506 = vmatprep.subr.mxu0 0.0
          %507 = vmatpush2.msra.mxu0 0.0
          %508 = vmatprep.subr.mxu0 0.0
          %509 = vmatpush2.msra.mxu0 0.0
          %510 = vmatprep.subr.mxu0 0.0
          %511 = vmatpush2.msra.mxu0 0.0
          %512 = vmatprep.subr.mxu0 0.0
          %513 = vmatpush2.msra.mxu0 0.0
          %514 = vmatprep.subr.mxu0 0.0
          %515 = vmatpush2.msra.mxu0 0.0
          %516 = vmatprep.subr.mxu0 0.0
          %517 = vmatpush2.msra.mxu0 0.0
          %518 = vmatprep.subr.mxu0 0.0
          %519 = vmatpush2.msra.mxu0 0.0
          %520 = vmatprep.subr.mxu0 0.0
          %521 = vmatpush2.msra.mxu0 0.0
          %522 = vmatprep.mubr.f32.mxu0 0.0
          %523 = vmatmul.mubr.f32.gmra.mxu0 %v449
          %v524 = vpop.f32.mrf.mxu0
          %v525 = vadd.f32 %v445, %v524
          %v526 = vpop.f32.mrf.mxu0
          %v527 = vadd.f32 %v445, %v526
          %528 = vdwg.mxu0
          %v529 = vxor.u32 %v525, 2147483648
          %v530 = vxor.u32 %v527, 2147483648
          %v531 = vmul.f32 %v529, 1.442695
          %v532 = vpow.pop %v531
          %v533 = vmul.f32 %v530, 1.442695
          %v534 = vpow.pop %v533
          %v535 = vadd.f32 %v532, 1.0
          %v536 = vadd.f32 %v534, 1.0
          %v537 = vrcp.pop %v535
          %v538 = vmul.f32 1.0, %v537
          %v539 = vrcp.pop %v536
          %v540 = vmul.f32 1.0, %v539
          %541 = vst [vmem:[#allocation2] sm:$0xff] %v538
          %542 = vst [vmem:[#allocation2 + $0x8] sm:$0xff] %v540
        $region56: #{tpu_custom_call.1} parent=43 // pred_fallthru
          _
        %v543 = vld [vmem:[#allocation2] sm:$0xff]
        %v544 = vld [vmem:[#allocation2 + $0x8] sm:$0xff]
        %v547 = vcombine.low %v543, %v544
        %v548 = vcombine.high %v543, %v544
        %v550 = vunpack.c.l.s4 1966171168
        %v551 = vunpack.c.0.s8 %v550
        %v552 = vlaneseq
        %v553 = vshrl.u32 %v552, 7
        %v554 = vsub.s32 %v551, %v553
        %v555 = vrot.slane %v547, %v554
        %v557 = vunpack.c.l.s4 1966171168
        %v558 = vunpack.c.0.s8 %v557
        %v559 = vlaneseq
        %v560 = vshrl.u32 %v559, 7
        %v561 = vsub.s32 %v558, %v560
        %v562 = vrot.slane %v548, %v561
        %v563 = vcombine.high %v555, %v555
        %v564 = vcombine.high %v562, %v562
        %v566 = vunpack.c.l.s4 1966171168
        %v567 = vunpack.c.0.s8 %v566
        %v568 = vlaneseq
        %v569 = vshrl.u32 %v568, 7
        %v570 = vsub.s32 %v567, %v569
        %v571 = vrot.slane %v555, %v570
        %v573 = vunpack.c.l.s4 1966171168
        %v574 = vunpack.c.0.s8 %v573
        %v575 = vlaneseq
        %v576 = vshrl.u32 %v575, 7
        %v577 = vsub.s32 %v574, %v576
        %v578 = vrot.slane %v562, %v577
        %v580 = vunpack.c.l.s4 1966171168
        %v581 = vunpack.c.0.s8 %v580
        %v582 = vlaneseq
        %v583 = vshrl.u32 %v582, 7
        %v584 = vsub.s32 %v581, %v583
        %v585 = vrot.slane %v563, %v584
        %v587 = vunpack.c.l.s4 1966171168
        %v588 = vunpack.c.0.s8 %v587
        %v589 = vlaneseq
        %v590 = vshrl.u32 %v589, 7
        %v591 = vsub.s32 %v588, %v590
        %v592 = vrot.slane %v564, %v591
        %v593 = vcombine.high %v571, %v571
        %v594 = vcombine.high %v578, %v578
        %v595 = vcombine.high %v585, %v585
        %v596 = vcombine.high %v592, %v592
        %v597 = vld [vmem:[%s309] sm:$0xff]
        %v598 = vld [vmem:[%s309 + $0x8] sm:$0xff]
        %v599 = vld [vmem:[%s309 + $0x10] sm:$0xff]
        %v600 = vld [vmem:[%s309 + $0x18] sm:$0xff]
        %v601 = vld [vmem:[%s309 + $0x20] sm:$0xff]
        %v602 = vld [vmem:[%s309 + $0x28] sm:$0xff]
        %v603 = vld [vmem:[%s309 + $0x30] sm:$0xff]
        %v604 = vld [vmem:[%s309 + $0x38] sm:$0xff]
        %v605 = vlaneseq
        %v606 = vshrl.u32 %v605, 7
        %v607 = vsub.s32 0, %v606
        %v608 = vrot.slane %v571, %v607
        %v609 = vlaneseq
        %v610 = vshrl.u32 %v609, 7
        %v611 = vsub.s32 1, %v610
        %v612 = vrot.slane %v571, %v611
        %v613 = vlaneseq
        %v614 = vshrl.u32 %v613, 7
        %v615 = vsub.s32 0, %v614
        %v616 = vrot.slane %v585, %v615
        %v617 = vlaneseq
        %v618 = vshrl.u32 %v617, 7
        %v619 = vsub.s32 1, %v618
        %v620 = vrot.slane %v585, %v619
        %v621 = vlaneseq
        %v622 = vshrl.u32 %v621, 7
        %v623 = vsub.s32 0, %v622
        %v624 = vrot.slane %v593, %v623
        %v625 = vlaneseq
        %v626 = vshrl.u32 %v625, 7
        %v627 = vsub.s32 1, %v626
        %v628 = vrot.slane %v593, %v627
        %v629 = vlaneseq
        %v630 = vshrl.u32 %v629, 7
        %v631 = vsub.s32 0, %v630
        %v632 = vrot.slane %v595, %v631
        %v633 = vlaneseq
        %v634 = vshrl.u32 %v633, 7
        %v635 = vsub.s32 1, %v634
        %v636 = vrot.slane %v595, %v635
        %v637 = vlaneseq
        %v638 = vshrl.u32 %v637, 7
        %v639 = vsub.s32 0, %v638
        %v640 = vrot.slane %v578, %v639
        %v641 = vlaneseq
        %v642 = vshrl.u32 %v641, 7
        %v643 = vsub.s32 1, %v642
        %v644 = vrot.slane %v578, %v643
        %v645 = vlaneseq
        %v646 = vshrl.u32 %v645, 7
        %v647 = vsub.s32 0, %v646
        %v648 = vrot.slane %v592, %v647
        %v649 = vlaneseq
        %v650 = vshrl.u32 %v649, 7
        %v651 = vsub.s32 1, %v650
        %v652 = vrot.slane %v592, %v651
        %v653 = vlaneseq
        %v654 = vshrl.u32 %v653, 7
        %v655 = vsub.s32 0, %v654
        %v656 = vrot.slane %v594, %v655
        %v657 = vlaneseq
        %v658 = vshrl.u32 %v657, 7
        %v659 = vsub.s32 1, %v658
        %v660 = vrot.slane %v594, %v659
        %v661 = vlaneseq
        %v662 = vshrl.u32 %v661, 7
        %v663 = vsub.s32 0, %v662
        %v664 = vrot.slane %v596, %v663
        %v665 = vlaneseq
        %v666 = vshrl.u32 %v665, 7
        %v667 = vsub.s32 1, %v666
        %v668 = vrot.slane %v596, %v667
        %v693 = vcombine.high %v597, %v597
        %v694 = vcombine.high %v598, %v598
        %v695 = vcombine.high %v599, %v599
        %v696 = vcombine.high %v600, %v600
        %v697 = vcombine.high %v601, %v601
        %v698 = vcombine.high %v602, %v602
        %v699 = vcombine.high %v603, %v603
        %v700 = vcombine.high %v604, %v604
        %v709 = vmul.f32 %v608, %v597
        %v710 = vmul.f32 %v612, %v693
        %v711 = vmul.f32 %v616, %v598
        %v712 = vmul.f32 %v620, %v694
        %v713 = vmul.f32 %v624, %v599
        %v714 = vmul.f32 %v628, %v695
        %v715 = vmul.f32 %v632, %v600
        %v716 = vmul.f32 %v636, %v696
        %v717 = vmul.f32 %v640, %v601
        %v718 = vmul.f32 %v644, %v697
        %v719 = vmul.f32 %v648, %v602
        %v720 = vmul.f32 %v652, %v698
        %v721 = vmul.f32 %v656, %v603
        %v722 = vmul.f32 %v660, %v699
        %v723 = vmul.f32 %v664, %v604
        %v724 = vmul.f32 %v668, %v700
        %v741 = vcombine.low %v709, %v710
        %v742 = vcombine.low %v711, %v712
        %v743 = vcombine.low %v713, %v714
        %v744 = vcombine.low %v715, %v716
        %v745 = vcombine.low %v717, %v718
        %v746 = vcombine.low %v719, %v720
        %v747 = vcombine.low %v721, %v722
        %v748 = vcombine.low %v723, %v724
        %757 = vst [vmem:[%s342] sm:$0xff] %v741
        %758 = vst [vmem:[%s342 + $0x8] sm:$0xff] %v742
        %759 = vst [vmem:[%s342 + $0x10] sm:$0xff] %v743
        %760 = vst [vmem:[%s342 + $0x18] sm:$0xff] %v744
        %761 = vst [vmem:[%s342 + $0x20] sm:$0xff] %v745
        %762 = vst [vmem:[%s342 + $0x28] sm:$0xff] %v746
        %763 = vst [vmem:[%s342 + $0x30] sm:$0xff] %v747
        %764 = vst [vmem:[%s342 + $0x38] sm:$0xff] %v748
        %s765 = sand.u32 %s199, 1
        %s766 = scalar_lea.sflag [#allocation5], %s765
        %s767 = sand.u32 %s199, 1
        %s768 = smul.addr %s767, 64
        %s769 = scalar_lea.vmem [#allocation8], %s768
        // Predicated region
        $region57: #{tpu_custom_call.1} parent=43 // pred_check
          %p770 = pneg %p209
        $region58: #{tpu_custom_call.1} parent=43 // pred_check_branch
          %772 = sbr.rel (%p770) target = $region60
        $region59: #{tpu_custom_call.1} parent=43 // pred_region
          %s773 = smul.u32 2, %s32
          %s775 = ssub.s32 1024, 1024
          %776 = vsyncadd %s766, %s775
          %s777 = smul.addr %s33, 2
          %s778 = sadd.s32 %s773, %s777
          %s779 = smul.addr %s31, 16
          %s780 = sadd.s32 %s778, %s779
          %s781 = smul.addr %s780, 64
          %s782 = scalar_lea.hbm %s6, %s781
          %s783 = sshll.u32 %s769, 4
          %s784 = int_to_ptr.vmem [resolvable:$true] %s783
          %789 = dma.vmem_to_hbm [thread:$0]  %s784, 1024, %s782, %s766, 128, 128, 8
        $region60: #{tpu_custom_call.1} parent=43 // pred_fallthru
          _
      $region44: #{tpu_custom_call.1} parent=5 // pred_fallthru
        _
      %p790 = scmp.le.s32.totalorder 2, %s21
      // Predicated region
      $region61: #{tpu_custom_call.1} parent=5 // pred_check
        %p791 = pneg %p790
      $region62: #{tpu_custom_call.1} parent=5 // pred_check_branch
        %793 = sbr.rel (%p791) target = $region64
      $region63: #{tpu_custom_call.1} parent=5 // pred_region
        %s794 = ssub.s32 %s21, 2
        // Predicated region
        $region65: #{tpu_custom_call.1} parent=63 // pred_check
          %p795 = pneg %p215
        $region66: #{tpu_custom_call.1} parent=63 // pred_check_branch
          %797 = sbr.rel (%p795) target = $region68
        $region67: #{tpu_custom_call.1} parent=63 // pred_region
          %s798 = sand.u32 %s200, 1
          %s799 = scalar_lea.sflag [#allocation5], %s798
          %s800 = sand.u32 %s200, 1
          %s801 = smul.addr %s800, 64
          %s802 = scalar_lea.vmem [#allocation8], %s801
          %803 = dma.done %s799, 1024
        $region68: #{tpu_custom_call.1} parent=63 // pred_fallthru
          _
      $region64: #{tpu_custom_call.1} parent=5 // pred_fallthru
        _
    $region6: #{tpu_custom_call.1} parent=1 // loop_footer
      %s25 = sadd.s32 1, %s21
    $region7: #{tpu_custom_call.1} parent=1 // loop_footer_branch
      %20 = sbr.rel target = $region3
    $region8: #{tpu_custom_call.1} parent=1 // loop_exit
      _
    %804 = vsyncpa [#allocation4], 1
    %s805 = scalar_lea.sflag [#allocation4], 1
    %806 = vsyncpa %s805, 1
    %807 = vsyncpa [#allocation7], 1
    %s808 = scalar_lea.sflag [#allocation7], 1
    %809 = vsyncpa %s808, 1
    %810 = vsyncpa [#allocation5], 1
    %s811 = scalar_lea.sflag [#allocation5], 1
    %812 = vsyncpa %s811, 1

</llo_original>
